<compile_context>
chip_gen: v6e
topology: v6e:2x2x1
jax: 0.10.0
libtpu: 0.0.40
codegen_flags: <defaults>
</compile_context>

<pallas_src>
import math
import functools

import jax
import jax.numpy as jnp
from jax.experimental import pallas as pl
from jax.experimental.pallas import tpu as pltpu

_VMEM_LIMIT = 64 * 1024 * 1024


# --------------------------------------------------------------------------
# Kernel 1: fused QKV projection
# --------------------------------------------------------------------------

def _qkv_kernel(x_ref, wqkv_ref, bqkv_ref, q_ref, k_ref, v_ref):
    x = x_ref[0].astype(jnp.bfloat16)                              # (TS, D)
    qkv = jnp.dot(x, wqkv_ref[...],
                  preferred_element_type=jnp.float32) + bqkv_ref[...]
    D = q_ref.shape[-1]
    q_ref[0] = qkv[:, 0:D].astype(jnp.bfloat16)
    k_ref[0] = qkv[:, D:2 * D].astype(jnp.bfloat16)
    v_ref[0] = qkv[:, 2 * D:3 * D].astype(jnp.bfloat16)


def qkv_proj(x, wqkv, bqkv, *, ts):
    B, S, D = x.shape
    ns = S // ts
    qkv_shape = jax.ShapeDtypeStruct((B, S, D), jnp.bfloat16)
    act_spec = pl.BlockSpec((1, ts, D), lambda b, s: (b, s, 0))
    return pl.pallas_call(
        _qkv_kernel,
        out_shape=(qkv_shape, qkv_shape, qkv_shape),
        grid=(B, ns),
        in_specs=[
            act_spec,                                              # x
            pl.BlockSpec((D, 3 * D), lambda b, s: (0, 0)),         # Wqkv (D, 3D) bf16
            pl.BlockSpec((1, 3 * D), lambda b, s: (0, 0)),         # bqkv
        ],
        out_specs=(act_spec, act_spec, act_spec),
        compiler_params=pltpu.CompilerParams(
            dimension_semantics=("parallel", "parallel"),
            vmem_limit_bytes=_VMEM_LIMIT),
    )(x, wqkv, bqkv)


# --------------------------------------------------------------------------
# Kernel 2: flash attention (online softmax, causal, head-batched)
# --------------------------------------------------------------------------

def _flash_attn_kernel(q_ref, k_ref, v_ref, o_ref, m_sc, l_sc, acc_sc,
                       *, tq, tk, scale):
    qi = pl.program_id(1)
    ki = pl.program_id(2)

    @pl.when(ki == 0)
    def _init():
        m_sc[...] = jnp.full_like(m_sc, -1e30)
        l_sc[...] = jnp.zeros_like(l_sc)
        acc_sc[...] = jnp.zeros_like(acc_sc)

    # Fully-future KV blocks (ki > qi) are entirely masked: skip their compute.
    @pl.when(ki <= qi)
    def _accumulate():
        q = q_ref[0]                                               # (H, TQ, Dh) bf16
        k = k_ref[0]                                               # (H, TK, Dh) bf16
        v = v_ref[0]                                               # (H, TK, Dh) bf16
        s = jnp.einsum("hqd,hkd->hqk", q, k,
                       preferred_element_type=jnp.float32) * scale  # (H, TQ, TK) f32
        row = jax.lax.broadcasted_iota(jnp.int32, (tq, tk), 0) + qi * tq
        col = jax.lax.broadcasted_iota(jnp.int32, (tq, tk), 1) + ki * tk
        bias = jnp.where(col > row, jnp.float32(-1e30), jnp.float32(0.0))
        s = s + bias[None, :, :]

        m_prev = m_sc[...]
        m_new = jnp.maximum(m_prev, jnp.max(s, axis=-1, keepdims=True))
        alpha = jnp.exp(m_prev - m_new)
        p = jnp.exp(s - m_new)
        l_sc[...] = alpha * l_sc[...] + jnp.sum(p, axis=-1, keepdims=True)
        acc_sc[...] = alpha * acc_sc[...] + jnp.einsum(
            "hqk,hkd->hqd", p.astype(jnp.bfloat16), v,
            preferred_element_type=jnp.float32)
        m_sc[...] = m_new

    @pl.when(ki == pl.num_programs(2) - 1)
    def _finalize():
        ctx = acc_sc[...] * pl.reciprocal(l_sc[...], approx=True)
        o_ref[0] = ctx.astype(o_ref.dtype)


def flash_attention(q, k, v, *, tq, tk):
    B, H, S, Dh = q.shape
    nq, nk = S // tq, S // tk
    scale = 1.0 / math.sqrt(Dh)
    kern = functools.partial(_flash_attn_kernel, tq=tq, tk=tk, scale=scale)
    return pl.pallas_call(
        kern,
        out_shape=jax.ShapeDtypeStruct((B, H, S, Dh), jnp.bfloat16),
        grid=(B, nq, nk),
        in_specs=[
            pl.BlockSpec((1, H, tq, Dh), lambda b, qi, ki: (b, 0, qi, 0)),
            pl.BlockSpec((1, H, tk, Dh), lambda b, qi, ki: (b, 0, ki, 0)),
            pl.BlockSpec((1, H, tk, Dh), lambda b, qi, ki: (b, 0, ki, 0)),
        ],
        out_specs=pl.BlockSpec((1, H, tq, Dh), lambda b, qi, ki: (b, 0, qi, 0)),
        scratch_shapes=[
            pltpu.VMEM((H, tq, 1), jnp.float32),    # running max
            pltpu.VMEM((H, tq, 1), jnp.float32),    # running denom
            pltpu.VMEM((H, tq, Dh), jnp.float32),   # running context
        ],
        compiler_params=pltpu.CompilerParams(
            dimension_semantics=("parallel", "parallel", "arbitrary"),
            vmem_limit_bytes=_VMEM_LIMIT),
    )(q, k, v)


# --------------------------------------------------------------------------
# Kernel 3: attention output projection + LN1 + FFN (F-tiled) + LN2
# --------------------------------------------------------------------------

def _post_attn_ffn_kernel(ctx_ref, x_ref, wo_ref, bo_ref, g1_ref, be1_ref,
                          w1_ref, b1_ref, w2_ref, bf2_ref, g2_ref, be2_ref,
                          o_ref, y_sc, acc_sc):
    fi = pl.program_id(2)

    @pl.when(fi == 0)
    def _init():
        # single fused output projection: concat-of-heads (TS, D) @ Wo (D, D)
        attn = jnp.dot(ctx_ref[0], wo_ref[...],
                       preferred_element_type=jnp.float32) + bo_ref[...]
        y = x_ref[0] + attn                                        # residual, f32
        mu = jnp.mean(y, axis=-1, keepdims=True)
        var = jnp.mean((y - mu) ** 2, axis=-1, keepdims=True)
        y_sc[...] = (y - mu) * jax.lax.rsqrt(var + 1e-5) * g1_ref[...] + be1_ref[...]
        acc_sc[...] = jnp.zeros_like(acc_sc)

    # FFN chunk over the hidden dimension F (dropout = identity in eval mode).
    y_b = y_sc[...].astype(jnp.bfloat16)
    h1 = jnp.dot(y_b, w1_ref[...], preferred_element_type=jnp.float32) + b1_ref[...]
    h1 = jnp.maximum(h1, 0.0)
    acc_sc[...] += jnp.dot(h1.astype(jnp.bfloat16), w2_ref[...],
                           preferred_element_type=jnp.float32)

    @pl.when(fi == pl.num_programs(2) - 1)
    def _finalize():
        z = y_sc[...] + acc_sc[...] + bf2_ref[...]
        mu = jnp.mean(z, axis=-1, keepdims=True)
        var = jnp.mean((z - mu) ** 2, axis=-1, keepdims=True)
        o_ref[0] = ((z - mu) * jax.lax.rsqrt(var + 1e-5) * g2_ref[...]
                    + be2_ref[...]).astype(o_ref.dtype)


def post_attn_ffn(ctx, x, lp, *, ts, tf):
    B, S, D = x.shape
    F = lp["w1"].shape[1]
    ns, nf = S // ts, F // tf
    act_spec = pl.BlockSpec((1, ts, D), lambda b, s, f: (b, s, 0))
    vecD_spec = pl.BlockSpec((1, D), lambda b, s, f: (0, 0))
    return pl.pallas_call(
        _post_attn_ffn_kernel,
        out_shape=jax.ShapeDtypeStruct((B, S, D), x.dtype),
        grid=(B, ns, nf),
        in_specs=[
            act_spec,                                              # ctx (bf16)
            act_spec,                                              # x residual (f32)
            pl.BlockSpec((D, D), lambda b, s, f: (0, 0)),          # Wo
            vecD_spec,                                             # bo
            vecD_spec,                                             # ln1 gamma
            vecD_spec,                                             # ln1 beta
            pl.BlockSpec((D, tf), lambda b, s, f: (0, f)),         # W1 tile
            pl.BlockSpec((1, tf), lambda b, s, f: (0, f)),         # b1 tile
            pl.BlockSpec((tf, D), lambda b, s, f: (f, 0)),         # W2 tile
            vecD_spec,                                             # b2
            vecD_spec,                                             # ln2 gamma
            vecD_spec,                                             # ln2 beta
        ],
        out_specs=pl.BlockSpec((1, ts, D), lambda b, s, f: (b, s, 0)),
        scratch_shapes=[pltpu.VMEM((ts, D), jnp.float32),          # post-LN1 y
                        pltpu.VMEM((ts, D), jnp.float32)],         # FFN accumulator
        compiler_params=pltpu.CompilerParams(
            dimension_semantics=("parallel", "parallel", "arbitrary"),
            vmem_limit_bytes=_VMEM_LIMIT),
    )(ctx, x, lp["wo"], lp["bo"], lp["g1"], lp["be1"],
      lp["w1"], lp["bf1"], lp["w2"], lp["bf2"], lp["g2"], lp["be2"])


# --------------------------------------------------------------------------
# Kernel 4: vocabulary projection, tiled over V
# --------------------------------------------------------------------------

def _fc_out_kernel(x_ref, w_ref, b_ref, o_ref):
    x = x_ref[0].astype(jnp.bfloat16)                              # (TS, D)
    logits = jnp.dot(x, w_ref[...], preferred_element_type=jnp.float32) + b_ref[...]
    o_ref[0] = logits.astype(o_ref.dtype)


def fc_out(x, w, b, *, ts, tv):
    B, S, D = x.shape
    V = w.shape[1]
    ns, nv = S // ts, V // tv
    return pl.pallas_call(
        _fc_out_kernel,
        out_shape=jax.ShapeDtypeStruct((B, S, V), x.dtype),
        grid=(B, ns, nv),
        in_specs=[
            pl.BlockSpec((1, ts, D), lambda b, s, v: (b, s, 0)),
            pl.BlockSpec((D, tv), lambda b, s, v: (0, v)),
            pl.BlockSpec((1, tv), lambda b, s, v: (0, v)),
        ],
        out_specs=pl.BlockSpec((1, ts, tv), lambda b, s, v: (b, s, v)),
        compiler_params=pltpu.CompilerParams(
            dimension_semantics=("parallel", "parallel", "parallel"),
            vmem_limit_bytes=_VMEM_LIMIT),
    )(x, w, b)


# --------------------------------------------------------------------------
# Model: parameters + forward
# --------------------------------------------------------------------------

def make_positional_encoding(max_len, d_model):
    position = jnp.arange(max_len, dtype=jnp.float32)[:, None]
    div_term = jnp.exp(jnp.arange(0, d_model, 2, dtype=jnp.float32)
                       * (-math.log(10000.0) / d_model))
    pe = jnp.zeros((max_len, d_model), jnp.float32)
    pe = pe.at[:, 0::2].set(jnp.sin(position * div_term))
    pe = pe.at[:, 1::2].set(jnp.cos(position * div_term))
    return pe[None, :, :]


def init_params(key, vocab_size, d_model, nhead, num_layers, dim_ff, max_seq_len):
    keys = jax.random.split(key, 2 + num_layers)
    scale = 0.02
    params = {
        "embedding": scale * jax.random.normal(keys[0], (vocab_size, d_model), jnp.float32),
        "pe": make_positional_encoding(max_seq_len, d_model),
        # weights stored as (in_dim, out_dim) in bf16 (MXU-native)
        "fc_w": (scale * jax.random.normal(keys[1], (d_model, vocab_size))).astype(jnp.bfloat16),
        "fc_b": jnp.zeros((1, vocab_size), jnp.float32),
        "layers": [],
    }
    for l in range(num_layers):
        lk = jax.random.split(keys[2 + l], 4)
        params["layers"].append({
            "wqkv": (scale * jax.random.normal(lk[0], (d_model, 3 * d_model))).astype(jnp.bfloat16),
            "bqkv": jnp.zeros((1, 3 * d_model), jnp.float32),
            "wo":   (scale * jax.random.normal(lk[1], (d_model, d_model))).astype(jnp.bfloat16),
            "bo":   jnp.zeros((1, d_model), jnp.float32),
            "g1":   jnp.ones((1, d_model), jnp.float32),
            "be1":  jnp.zeros((1, d_model), jnp.float32),
            "w1":   (scale * jax.random.normal(lk[2], (d_model, dim_ff))).astype(jnp.bfloat16),
            "bf1":  jnp.zeros((1, dim_ff), jnp.float32),
            "w2":   (scale * jax.random.normal(lk[3], (dim_ff, d_model))).astype(jnp.bfloat16),
            "bf2":  jnp.zeros((1, d_model), jnp.float32),
            "g2":   jnp.ones((1, d_model), jnp.float32),
            "be2":  jnp.zeros((1, d_model), jnp.float32),
        })
    return params


def music_transformer_forward(src, params, nhead, *, tq=16, ts=16, tf=128, tv=128):
    B, S = src.shape
    D = params["embedding"].shape[1]
    H = nhead
    Dh = D // H
    assert S % ts == 0 and S % tq == 0

    # embedding lookup + positional encoding (gather / add glue in plain JAX)
    x = params["embedding"][src] + params["pe"][:, :S, :]          # (B, S, D) f32

    for lp in params["layers"]:
        # fused QKV projection (Pallas)
        q, k, v = qkv_proj(x, lp["wqkv"], lp["bqkv"], ts=ts)
        # head split: layout glue in plain JAX (keeps kernel blocks lane-dense)
        q = jnp.transpose(q.reshape(B, S, H, Dh), (0, 2, 1, 3))
        k = jnp.transpose(k.reshape(B, S, H, Dh), (0, 2, 1, 3))
        v = jnp.transpose(v.reshape(B, S, H, Dh), (0, 2, 1, 3))
        # flash attention with online softmax + causal block skipping (Pallas)
        ctx = flash_attention(q, k, v, tq=tq, tk=tq)               # (B, H, S, Dh)
        ctx = jnp.transpose(ctx, (0, 2, 1, 3)).reshape(B, S, D)    # concat heads
        # output projection + LN1 + F-tiled FFN + LN2 (Pallas)
        x = post_attn_ffn(ctx, x, lp, ts=ts, tf=tf)

    # final vocabulary projection, V-tiled (Pallas)
    return fc_out(x, params["fc_w"], params["fc_b"], ts=ts, tv=tv)


# --------------------------------------------------------------------------
# Main
# --------------------------------------------------------------------------

if __name__ == "__main__":
    # small but lane-dense demo config (last dims multiples of 128)
    vocab_size = 256
    d_model = 128
    nhead = 4
    num_layers = 2
    dim_feedforward = 256
    max_seq_len = 64
    batch, seq = 2, 32

    key = jax.random.PRNGKey(0)
    pkey, skey = jax.random.split(key)
    params = init_params(pkey, vocab_size, d_model, nhead, num_layers,
                         dim_feedforward, max_seq_len)
    src = jax.random.randint(skey, (batch, seq), 0, vocab_size, dtype=jnp.int32)

    logits = music_transformer_forward(src, params, nhead)
    logits = jax.block_until_ready(logits)

    assert logits.shape == (batch, seq, vocab_size)
    assert bool(jnp.all(jnp.isfinite(logits)))
    print("KERNEL_OK")
</pallas_src>

<mosaic_0001>
module attributes {stable_mosaic.version = 11 : i64} {
  func.func @_qkv_kernel(%arg0: i32, %arg1: i32, %arg2: memref<1x16x128xf32, #tpu.memory_space<vmem>>, %arg3: memref<128x384xbf16, #tpu.memory_space<vmem>>, %arg4: memref<1x384xf32, #tpu.memory_space<vmem>>, %arg5: memref<1x16x128xbf16, #tpu.memory_space<vmem>>, %arg6: memref<1x16x128xbf16, #tpu.memory_space<vmem>>, %arg7: memref<1x16x128xbf16, #tpu.memory_space<vmem>>) attributes {dimension_semantics = [#tpu.dimension_semantics<parallel>, #tpu.dimension_semantics<parallel>], iteration_bounds = array<i64: 2, 2>, scalar_prefetch = 0 : i64, scratch_operands = 0 : i64, tpu.core_type = #tpu.core_type<tc>, window_params = [{transform_indices = @transform_0, window_bounds = array<i64: 1, 16, 128>}, {pipeline_mode = #tpu.pipeline_mode<synchronous>, transform_indices = @transform_1, window_bounds = array<i64: 128, 384>}, {pipeline_mode = #tpu.pipeline_mode<synchronous>, transform_indices = @transform_2, window_bounds = array<i64: 1, 384>}, {transform_indices = @transform_3, window_bounds = array<i64: 1, 16, 128>}, {transform_indices = @transform_4, window_bounds = array<i64: 1, 16, 128>}, {transform_indices = @transform_5, window_bounds = array<i64: 1, 16, 128>}]} {
    %c0 = arith.constant 0 : index
    %c0_0 = arith.constant 0 : index
    %c0_1 = arith.constant 0 : index
    %0 = vector.load %arg2[%c0, %c0_0, %c0_1] : memref<1x16x128xf32, #tpu.memory_space<vmem>>, vector<1x16x128xf32>
    %1 = vector.shape_cast %0 : vector<1x16x128xf32> to vector<16x128xf32>
    %2 = arith.truncf %1 : vector<16x128xf32> to vector<16x128xbf16>
    %c0_2 = arith.constant 0 : index
    %c0_3 = arith.constant 0 : index
    %3 = vector.load %arg3[%c0_2, %c0_3] : memref<128x384xbf16, #tpu.memory_space<vmem>>, vector<128x384xbf16>
    %cst = arith.constant dense<0.000000e+00> : vector<16x384xf32>
    %4 = tpu.matmul %2, %3, %cst {dimension_numbers = #tpu.dot_dimension_numbers<[1], [0], [0], [1], [0, 0, 1, 1], [], []>} : vector<16x128xbf16>, vector<128x384xbf16>, vector<16x384xf32> -> vector<16x384xf32>
    %c0_4 = arith.constant 0 : index
    %c0_5 = arith.constant 0 : index
    %5 = vector.load %arg4[%c0_4, %c0_5] : memref<1x384xf32, #tpu.memory_space<vmem>>, vector<1x384xf32>
    %6 = vector.broadcast %5 : vector<1x384xf32> to vector<16x384xf32>
    %7 = arith.addf %4, %6 : vector<16x384xf32>
    %8 = vector.extract_strided_slice %7 {offsets = [0, 0], sizes = [16, 128], strides = [1, 1]} : vector<16x384xf32> to vector<16x128xf32>
    %9 = arith.truncf %8 : vector<16x128xf32> to vector<16x128xbf16>
    %c0_6 = arith.constant 0 : index
    %c0_7 = arith.constant 0 : index
    %c0_8 = arith.constant 0 : index
    %10 = vector.load %arg5[%c0_6, %c0_7, %c0_8] : memref<1x16x128xbf16, #tpu.memory_space<vmem>>, vector<1x16x128xbf16>
    %11 = vector.shape_cast %10 : vector<1x16x128xbf16> to vector<16x128xbf16>
    %12 = vector.shape_cast %9 : vector<16x128xbf16> to vector<1x16x128xbf16>
    tpu.vector_store %arg5[%c0_6, %c0_7, %c0_8], %12 {strides = array<i32>} : memref<1x16x128xbf16, #tpu.memory_space<vmem>>, vector<1x16x128xbf16>,
    %13 = vector.extract_strided_slice %7 {offsets = [0, 128], sizes = [16, 128], strides = [1, 1]} : vector<16x384xf32> to vector<16x128xf32>
    %14 = arith.truncf %13 : vector<16x128xf32> to vector<16x128xbf16>
    %c0_9 = arith.constant 0 : index
    %c0_10 = arith.constant 0 : index
    %c0_11 = arith.constant 0 : index
    %15 = vector.load %arg6[%c0_9, %c0_10, %c0_11] : memref<1x16x128xbf16, #tpu.memory_space<vmem>>, vector<1x16x128xbf16>
    %16 = vector.shape_cast %15 : vector<1x16x128xbf16> to vector<16x128xbf16>
    %17 = vector.shape_cast %14 : vector<16x128xbf16> to vector<1x16x128xbf16>
    tpu.vector_store %arg6[%c0_9, %c0_10, %c0_11], %17 {strides = array<i32>} : memref<1x16x128xbf16, #tpu.memory_space<vmem>>, vector<1x16x128xbf16>,
    %18 = vector.extract_strided_slice %7 {offsets = [0, 256], sizes = [16, 128], strides = [1, 1]} : vector<16x384xf32> to vector<16x128xf32>
    %19 = arith.truncf %18 : vector<16x128xf32> to vector<16x128xbf16>
    %c0_12 = arith.constant 0 : index
    %c0_13 = arith.constant 0 : index
    %c0_14 = arith.constant 0 : index
    %20 = vector.load %arg7[%c0_12, %c0_13, %c0_14] : memref<1x16x128xbf16, #tpu.memory_space<vmem>>, vector<1x16x128xbf16>
    %21 = vector.shape_cast %20 : vector<1x16x128xbf16> to vector<16x128xbf16>
    %22 = vector.shape_cast %19 : vector<16x128xbf16> to vector<1x16x128xbf16>
    tpu.vector_store %arg7[%c0_12, %c0_13, %c0_14], %22 {strides = array<i32>} : memref<1x16x128xbf16, #tpu.memory_space<vmem>>, vector<1x16x128xbf16>,
    return
  }
  func.func @transform_0(%arg0: i32, %arg1: i32) -> (i32, i32, i32) {
    %c0_i32 = arith.constant 0 : i32
    %c0_i32_0 = arith.constant 0 : i32
    return %arg0, %arg1, %c0_i32 : i32, i32, i32
  }
  func.func @transform_1(%arg0: i32, %arg1: i32) -> (i32, i32) {
    %c0_i32 = arith.constant 0 : i32
    %c0_i32_0 = arith.constant 0 : i32
    %c0_i32_1 = arith.constant 0 : i32
    return %c0_i32, %c0_i32_0 : i32, i32
  }
  func.func @transform_2(%arg0: i32, %arg1: i32) -> (i32, i32) {
    %c0_i32 = arith.constant 0 : i32
    %c0_i32_0 = arith.constant 0 : i32
    %c0_i32_1 = arith.constant 0 : i32
    return %c0_i32, %c0_i32_0 : i32, i32
  }
  func.func @transform_3(%arg0: i32, %arg1: i32) -> (i32, i32, i32) {
    %c0_i32 = arith.constant 0 : i32
    %c0_i32_0 = arith.constant 0 : i32
    return %arg0, %arg1, %c0_i32 : i32, i32, i32
  }
  func.func @transform_4(%arg0: i32, %arg1: i32) -> (i32, i32, i32) {
    %c0_i32 = arith.constant 0 : i32
    %c0_i32_0 = arith.constant 0 : i32
    return %arg0, %arg1, %c0_i32 : i32, i32, i32
  }
  func.func @transform_5(%arg0: i32, %arg1: i32) -> (i32, i32, i32) {
    %c0_i32 = arith.constant 0 : i32
    %c0_i32_0 = arith.constant 0 : i32
    return %arg0, %arg1, %c0_i32 : i32, i32, i32
  }
}

</mosaic_0001>

<llo_original>
// kernel: tpu_custom_call.1
$region0: #{tpu_custom_call.1}
  #allocation0 [shape = 'u32[]', space=smem, size = 0x4, offset = 0x4, fixed_abs, tag = 'smem constant byte address 0x4 - core index']
  #allocation1 [shape = 'u32[144,128]{1,0:T(1,128)}', space=vmem, size = 0x12000, scoped, tag = 'internal scratch']
  %s0 = inlined_call_operand.hbm [shape: f32[2,32,128], index: 0, kind: input, shape index: {}]
  %s1 = inlined_call_operand.hbm [shape: bf16[128,384], index: 1, kind: input, shape index: {}]
  %s2 = inlined_call_operand.vmem [shape: f32[1,384], index: 2, kind: input, shape index: {}]
  %s3 = inlined_call_operand.hbm [shape: bf16[2,32,128], index: 3, kind: output, shape index: {0}]
  %s4 = inlined_call_operand.hbm [shape: bf16[2,32,128], index: 4, kind: output, shape index: {1}]
  %s5 = inlined_call_operand.hbm [shape: bf16[2,32,128], index: 5, kind: output, shape index: {2}]
  %6 = xla_tuple %s3, %s4, %s5
  %s7 = sld [smem:[#allocation0]]
  $region69: #{tpu_custom_call.1} parent=0
    _
  %s9 = ssub.s32 1, %s7
  %s10 = scalar_select 0, %s9, %s7
  $region1: #{tpu_custom_call.1} parent=0
    #allocation2 [shape = 'u8[16384]{0}', space=vmem, size = 0x4000, scoped, tag = 'input window, operand 0']
    #allocation3 [shape = 's32[2]{0}', space=sflag, size = 0x8, scoped, tag = 'scoped memory for tpu_custom_call.1']
    #allocation4 [shape = 's32[2]{0}', space=sflag, size = 0x8, scoped, tag = 'scoped memory for tpu_custom_call.1']
    #allocation5 [shape = 'u8[98304]{0}', space=vmem, size = 0x18000, scoped, tag = 'input window, operand 1, single buffered']
    #allocation6 [shape = 's32[1]{0}', space=sflag, size = 0x4, scoped, tag = 'scoped memory for tpu_custom_call.1']
    #allocation7 [shape = 'u8[8192]{0}', space=vmem, size = 0x2000, scoped, tag = 'output window, operand 0']
    #allocation8 [shape = 'u8[8192]{0}', space=vmem, size = 0x2000, scoped, tag = 'output window, operand 1']
    #allocation9 [shape = 's32[2]{0}', space=sflag, size = 0x8, scoped, tag = 'scoped memory for tpu_custom_call.1']
    #allocation10 [shape = 'u8[8192]{0}', space=vmem, size = 0x2000, scoped, tag = 'output window, operand 2']
    %11 = vsyncpa [#allocation3], 0
    %s12 = scalar_lea.sflag [#allocation3], 1
    %13 = vsyncpa %s12, 0
    %14 = vsyncpa [#allocation6], 0
    %15 = vsyncpa [#allocation4], 0
    %s16 = scalar_lea.sflag [#allocation4], 1
    %17 = vsyncpa %s16, 0
    %18 = vsyncpa [#allocation9], 0
    %s19 = scalar_lea.sflag [#allocation9], 1
    %20 = vsyncpa %s19, 0
    loop: start=0, step=1, limit=6
    $region2: #{tpu_custom_call.1} parent=1 // loop_pre_header
      _
    $region3: #{tpu_custom_call.1} parent=1 // loop_header
      %s22 = sphi 0, %s26
      %p23 = scmp.ge.s32.totalorder %s22, 6
      %s29 = sphi 0, %s41
      %s30 = sphi 0, %s37
      %s31 = sphi 0, %s29
      %s32 = sphi 0, %s30
      %s33 = sphi 0, %s31
      %s34 = sphi 0, %s32
      %s46 = sphi 0, %s48
      %s49 = sphi 0, %s46
      %s50 = sphi 0, %s49
      %s66 = sphi 0, %s50
      %s70 = sphi 0, %s70
      %s72 = sphi 0, %s70
      %s73 = sphi 0, %s72
      %s87 = sphi 0, %s73
      %s91 = sphi 0, %s91
      %s93 = sphi 0, %s91
      %s94 = sphi 0, %s93
      %s108 = sphi 0, %s94
      %s116 = sphi 0, %s118
      %s119 = sphi 0, %s116
      %s120 = sphi 0, %s119
      %s136 = sphi 0, %s120
      %s144 = sphi 0, %s146
      %s147 = sphi 0, %s144
      %s148 = sphi 0, %s147
      %s164 = sphi 0, %s148
      %s172 = sphi 0, %s174
      %s175 = sphi 0, %s172
      %s176 = sphi 0, %s175
      %s192 = sphi 0, %s176
    $region4: #{tpu_custom_call.1} parent=1 // loop_header_branch
      %25 = sbr.rel (%p23) target = $region8
    $region5: #{tpu_custom_call.1} parent=1 // loop_body
      %s27 = ssub.s32 %s22, 1
      %s28 = ssub.s32 %s22, 2
      %s35 = sadd.s32 1, %s30
      %p36 = scmp.ge.s32.totalorder %s35, 2
      %s37 = scalar_select %p36, 0, %s35
      %s38 = sadd.s32 1, %s29
      %s39 = scalar_select %p36, %s38, %s29
      %p40 = scmp.ge.s32.totalorder %s39, 2
      %s41 = scalar_select %p40, 0, %s39
      %s42 = ssub.s32 %s29, %s41
      %s43 = ssub.s32 %s30, %s37
      %s44 = sor.u32 %s42, %s43
      %p45 = scmp.eq.s32.totalorder %s44, 0
      %s47 = sadd.s32 %s46, 1
      %s48 = scalar_select %p45, %s46, %s47
      %p51 = pneg %p45
      %p52 = scmp.eq.s32.totalorder %s22, 3
      %p53 = por %p51, %p52
      %p54 = scmp.ne.s32.totalorder %s46, %s49
      %p55 = scmp.eq.s32.totalorder %s22, 0
      %p56 = por %p54, %p55
      %p57 = scmp.ne.s32.totalorder %s46, %s49
      %p58 = scmp.eq.s32.totalorder %s27, 3
      %p59 = por %p57, %p58
      %p60 = scmp.ne.s32.totalorder %s49, %s50
      %p61 = scmp.eq.s32.totalorder %s27, 0
      %p62 = por %p60, %p61
      %p63 = scmp.ne.s32.totalorder %s49, %s50
      %p64 = scmp.eq.s32.totalorder %s28, 3
      %p65 = por %p63, %p64
      %p67 = scmp.ne.s32.totalorder %s50, %s66
      %p68 = scmp.eq.s32.totalorder %s28, 0
      %p69 = por %p67, %p68
      %s71 = sadd.s32 %s70, 1
      %p74 = scmp.eq.s32.totalorder %s22, 3
      %p75 = scmp.ne.s32.totalorder %s70, %s72
      %p76 = scmp.eq.s32.totalorder %s22, 0
      %p77 = por %p75, %p76
      %p78 = scmp.ne.s32.totalorder %s70, %s72
      %p79 = scmp.eq.s32.totalorder %s27, 3
      %p80 = por %p78, %p79
      %p81 = scmp.ne.s32.totalorder %s72, %s73
      %p82 = scmp.eq.s32.totalorder %s27, 0
      %p83 = por %p81, %p82
      %p84 = scmp.ne.s32.totalorder %s72, %s73
      %p85 = scmp.eq.s32.totalorder %s28, 3
      %p86 = por %p84, %p85
      %p88 = scmp.ne.s32.totalorder %s73, %s87
      %p89 = scmp.eq.s32.totalorder %s28, 0
      %p90 = por %p88, %p89
      %s92 = sadd.s32 %s91, 1
      %p95 = scmp.eq.s32.totalorder %s22, 3
      %p96 = scmp.ne.s32.totalorder %s91, %s93
      %p97 = scmp.eq.s32.totalorder %s22, 0
      %p98 = por %p96, %p97
      %p99 = scmp.ne.s32.totalorder %s91, %s93
      %p100 = scmp.eq.s32.totalorder %s27, 3
      %p101 = por %p99, %p100
      %p102 = scmp.ne.s32.totalorder %s93, %s94
      %p103 = scmp.eq.s32.totalorder %s27, 0
      %p104 = por %p102, %p103
      %p105 = scmp.ne.s32.totalorder %s93, %s94
      %p106 = scmp.eq.s32.totalorder %s28, 3
      %p107 = por %p105, %p106
      %p109 = scmp.ne.s32.totalorder %s94, %s108
      %p110 = scmp.eq.s32.totalorder %s28, 0
      %p111 = por %p109, %p110
      %s112 = ssub.s32 %s29, %s41
      %s113 = ssub.s32 %s30, %s37
      %s114 = sor.u32 %s112, %s113
      %p115 = scmp.eq.s32.totalorder %s114, 0
      %s117 = sadd.s32 %s116, 1
      %s118 = scalar_select %p115, %s116, %s117
      %p121 = pneg %p115
      %p122 = scmp.eq.s32.totalorder %s22, 3
      %p123 = por %p121, %p122
      %p124 = scmp.ne.s32.totalorder %s116, %s119
      %p125 = scmp.eq.s32.totalorder %s22, 0
      %p126 = por %p124, %p125
      %p127 = scmp.ne.s32.totalorder %s116, %s119
      %p128 = scmp.eq.s32.totalorder %s27, 3
      %p129 = por %p127, %p128
      %p130 = scmp.ne.s32.totalorder %s119, %s120
      %p131 = scmp.eq.s32.totalorder %s27, 0
      %p132 = por %p130, %p131
      %p133 = scmp.ne.s32.totalorder %s119, %s120
      %p134 = scmp.eq.s32.totalorder %s28, 3
      %p135 = por %p133, %p134
      %p137 = scmp.ne.s32.totalorder %s120, %s136
      %p138 = scmp.eq.s32.totalorder %s28, 0
      %p139 = por %p137, %p138
      %s140 = ssub.s32 %s29, %s41
      %s141 = ssub.s32 %s30, %s37
      %s142 = sor.u32 %s140, %s141
      %p143 = scmp.eq.s32.totalorder %s142, 0
      %s145 = sadd.s32 %s144, 1
      %s146 = scalar_select %p143, %s144, %s145
      %p149 = pneg %p143
      %p150 = scmp.eq.s32.totalorder %s22, 3
      %p151 = por %p149, %p150
      %p152 = scmp.ne.s32.totalorder %s144, %s147
      %p153 = scmp.eq.s32.totalorder %s22, 0
      %p154 = por %p152, %p153
      %p155 = scmp.ne.s32.totalorder %s144, %s147
      %p156 = scmp.eq.s32.totalorder %s27, 3
      %p157 = por %p155, %p156
      %p158 = scmp.ne.s32.totalorder %s147, %s148
      %p159 = scmp.eq.s32.totalorder %s27, 0
      %p160 = por %p158, %p159
      %p161 = scmp.ne.s32.totalorder %s147, %s148
      %p162 = scmp.eq.s32.totalorder %s28, 3
      %p163 = por %p161, %p162
      %p165 = scmp.ne.s32.totalorder %s148, %s164
      %p166 = scmp.eq.s32.totalorder %s28, 0
      %p167 = por %p165, %p166
      %s168 = ssub.s32 %s29, %s41
      %s169 = ssub.s32 %s30, %s37
      %s170 = sor.u32 %s168, %s169
      %p171 = scmp.eq.s32.totalorder %s170, 0
      %s173 = sadd.s32 %s172, 1
      %s174 = scalar_select %p171, %s172, %s173
      %p177 = pneg %p171
      %p178 = scmp.eq.s32.totalorder %s22, 3
      %p179 = por %p177, %p178
      %p180 = scmp.ne.s32.totalorder %s172, %s175
      %p181 = scmp.eq.s32.totalorder %s22, 0
      %p182 = por %p180, %p181
      %p183 = scmp.ne.s32.totalorder %s172, %s175
      %p184 = scmp.eq.s32.totalorder %s27, 3
      %p185 = por %p183, %p184
      %p186 = scmp.ne.s32.totalorder %s175, %s176
      %p187 = scmp.eq.s32.totalorder %s27, 0
      %p188 = por %p186, %p187
      %p189 = scmp.ne.s32.totalorder %s175, %s176
      %p190 = scmp.eq.s32.totalorder %s28, 3
      %p191 = por %p189, %p190
      %p193 = scmp.ne.s32.totalorder %s176, %s192
      %p194 = scmp.eq.s32.totalorder %s28, 0
      %p195 = por %p193, %p194
      %p196 = scmp.le.s32.totalorder 1, %s22
      %p197 = scmp.lt.s32.totalorder %s22, 5
      %p198 = pnand %p196, %p197
      %p199 = pneg %p198
      // Predicated region
      $region9: #{tpu_custom_call.1} parent=5 // pred_check
        _
      $region10: #{tpu_custom_call.1} parent=5 // pred_check_branch
        %201 = sbr.rel (%p198) target = $region12
      $region11: #{tpu_custom_call.1} parent=5 // pred_region
        %s202 = ssub.s32 %s22, 1
        // Predicated region
        $region13: #{tpu_custom_call.1} parent=11 // pred_check
          %p203 = pneg %p83
        $region14: #{tpu_custom_call.1} parent=11 // pred_check_branch
          %205 = sbr.rel (%p203) target = $region16
        $region15: #{tpu_custom_call.1} parent=11 // pred_region
          %s207 = ssub.s32 3072, 3072
          %208 = vsyncadd [#allocation6], %s207
          %s209 = sshll.u32 [#allocation5], 4
          %s210 = int_to_ptr.vmem [resolvable:$true] %s209
          %215 = dma.hbm_to_vmem [thread:$0]  %s1, 3072, %s210, [#allocation6], 192, 192, 12
        $region16: #{tpu_custom_call.1} parent=11 // pred_fallthru
          _
        // Predicated region
        $region17: #{tpu_custom_call.1} parent=11 // pred_check
          %p216 = pneg %p104
        $region18: #{tpu_custom_call.1} parent=11 // pred_check_branch
          %218 = sbr.rel (%p216) target = $region20
        $region19: #{tpu_custom_call.1} parent=11 // pred_region
          _
        $region20: #{tpu_custom_call.1} parent=11 // pred_fallthru
          _
      $region12: #{tpu_custom_call.1} parent=5 // pred_fallthru
        _
      %p219 = scmp.lt.s32.totalorder %s22, 4
      // Predicated region
      $region21: #{tpu_custom_call.1} parent=5 // pred_check
        %p220 = pneg %p219
      $region22: #{tpu_custom_call.1} parent=5 // pred_check_branch
        %222 = sbr.rel (%p220) target = $region24
      $region23: #{tpu_custom_call.1} parent=5 // pred_region
        // Predicated region
        $region25: #{tpu_custom_call.1} parent=23 // pred_check
          %p223 = pneg %p56
        $region26: #{tpu_custom_call.1} parent=23 // pred_check_branch
          %225 = sbr.rel (%p223) target = $region28
        $region27: #{tpu_custom_call.1} parent=23 // pred_region
          %s226 = sand.u32 %s46, 1
          %s227 = scalar_lea.sflag [#allocation3], %s226
          %s228 = sand.u32 %s46, 1
          %s229 = smul.addr %s228, 16
          %s230 = scalar_lea.vmem [#allocation2], %s229
          %s231 = smul.u32 2, %s30
          %s233 = ssub.s32 256, 256
          %234 = vsyncadd %s227, %s233
          %s235 = smul.addr %s29, 4
          %s236 = sadd.s32 %s231, %s235
          %s237 = smul.addr %s236, 128
          %s238 = scalar_lea.hbm %s0, %s237
          %s239 = sshll.u32 %s230, 4
          %s240 = int_to_ptr.vmem [resolvable:$true] %s239
          %245 = dma.hbm_to_vmem [thread:$0]  %s238, 256, %s240, %s227, 128, 128, 8
        $region28: #{tpu_custom_call.1} parent=23 // pred_fallthru
          _
      $region24: #{tpu_custom_call.1} parent=5 // pred_fallthru
        _
      %p246 = scmp.le.s32.totalorder 1, %s22
      %p247 = scmp.lt.s32.totalorder %s22, 5
      %p248 = pnand %p246, %p247
      %p249 = pneg %p248
      // Predicated region
      $region29: #{tpu_custom_call.1} parent=5 // pred_check
        _
      $region30: #{tpu_custom_call.1} parent=5 // pred_check_branch
        %251 = sbr.rel (%p248) target = $region32
      $region31: #{tpu_custom_call.1} parent=5 // pred_region
        %s252 = ssub.s32 %s22, 1
        %s253 = sand.u32 %s49, 1
        %s254 = scalar_lea.sflag [#allocation3], %s253
        %s255 = sand.u32 %s49, 1
        %s256 = smul.addr %s255, 16
        %s257 = scalar_lea.vmem [#allocation2], %s256
        // Predicated region
        $region33: #{tpu_custom_call.1} parent=31 // pred_check
          %p258 = pneg %p62
        $region34: #{tpu_custom_call.1} parent=31 // pred_check_branch
          %260 = sbr.rel (%p258) target = $region36
        $region35: #{tpu_custom_call.1} parent=31 // pred_region
          %261 = dma.done %s254, 256
        $region36: #{tpu_custom_call.1} parent=31 // pred_fallthru
          _
        // Predicated region
        $region37: #{tpu_custom_call.1} parent=31 // pred_check
          %p262 = pneg %p83
        $region38: #{tpu_custom_call.1} parent=31 // pred_check_branch
          %264 = sbr.rel (%p262) target = $region40
        $region39: #{tpu_custom_call.1} parent=31 // pred_region
          %265 = dma.done [#allocation6], 3072
        $region40: #{tpu_custom_call.1} parent=31 // pred_fallthru
          _
        %s266 = sand.u32 %s49, 1
        %s267 = scalar_lea.sflag [#allocation3], %s266
        %s268 = sand.u32 %s49, 1
        %s269 = smul.addr %s268, 16
        %s270 = scalar_lea.vmem [#allocation2], %s269
        %p271 = pneg %p62
        %p272 = pneg %p59
        %p273 = pneg %p83
        %p274 = pneg %p80
        %p275 = pneg %p104
        %p276 = pneg %p101
        %p277 = pneg %p132
        %p278 = pneg %p129
        %s279 = sand.u32 %s119, 1
        %s280 = scalar_lea.sflag [#allocation4], %s279
        %s281 = sand.u32 %s119, 1
        %s282 = smul.addr %s281, 8
        %s283 = scalar_lea.vmem [#allocation7], %s282
        %p284 = pneg %p160
        %p285 = pneg %p157
        %s286 = sand.u32 %s27, 1
        %s287 = scalar_lea.sflag [#allocation9], %s286
        %s288 = sand.u32 %s147, 1
        %s289 = smul.addr %s288, 8
        %s290 = scalar_lea.vmem [#allocation8], %s289
        %p291 = pneg %p188
        %p292 = pneg %p185
        %s293 = sand.u32 %s27, 1
        %s294 = scalar_lea.sflag [#allocation9], %s293
        %s295 = sand.u32 %s175, 1
        %s296 = smul.addr %s295, 8
        %s297 = scalar_lea.vmem [#allocation10], %s296
        %s298 = smul.u32 2, %s32
        %s299 = smul.u32 2, %s32
        %s300 = smul.u32 2, %s32
        %s301 = smul.u32 2, %s32
        %v303 = vld [vmem:[%s257] sm:$0xff]
        %v304 = vld [vmem:[%s257 + $0x8] sm:$0xff]
        %v305 = vpack.c.bf16 %v304, %v303
        %v306 = vld [vmem:[#allocation5] sm:$0xff]
        %v307 = vld [vmem:[#allocation5 + $0x8] sm:$0xf]
        %v308 = vld [vmem:[#allocation5 + $0xc] sm:$0xff]
        %v309 = vld [vmem:[#allocation5 + $0x14] sm:$0xf]
        %v310 = vld [vmem:[#allocation5 + $0x18] sm:$0xff]
        %v311 = vld [vmem:[#allocation5 + $0x20] sm:$0xf]
        %v312 = vld [vmem:[#allocation5 + $0x24] sm:$0xff]
        %v313 = vld [vmem:[#allocation5 + $0x2c] sm:$0xf]
        %v314 = vld [vmem:[#allocation5 + $0x30] sm:$0xff]
        %v315 = vld [vmem:[#allocation5 + $0x38] sm:$0xf]
        %v316 = vld [vmem:[#allocation5 + $0x3c] sm:$0xff]
        %v317 = vld [vmem:[#allocation5 + $0x44] sm:$0xf]
        %v318 = vld [vmem:[#allocation5 + $0x48] sm:$0xff]
        %v319 = vld [vmem:[#allocation5 + $0x50] sm:$0xf]
        %v320 = vld [vmem:[#allocation5 + $0x54] sm:$0xff]
        %v321 = vld [vmem:[#allocation5 + $0x5c] sm:$0xf]
        %v322 = vld [vmem:[#allocation5 + $0x60] sm:$0xff]
        %v323 = vld [vmem:[#allocation5 + $0x68] sm:$0xf]
        %v324 = vld [vmem:[#allocation5 + $0x6c] sm:$0xff]
        %v325 = vld [vmem:[#allocation5 + $0x74] sm:$0xf]
        %v326 = vld [vmem:[#allocation5 + $0x78] sm:$0xff]
        %v327 = vld [vmem:[#allocation5 + $0x80] sm:$0xf]
        %v328 = vld [vmem:[#allocation5 + $0x84] sm:$0xff]
        %v329 = vld [vmem:[#allocation5 + $0x8c] sm:$0xf]
        %v330 = vld [vmem:[#allocation5 + $0x90] sm:$0xff]
        %v331 = vld [vmem:[#allocation5 + $0x98] sm:$0xf]
        %v332 = vld [vmem:[#allocation5 + $0x9c] sm:$0xff]
        %v333 = vld [vmem:[#allocation5 + $0xa4] sm:$0xf]
        %v334 = vld [vmem:[#allocation5 + $0xa8] sm:$0xff]
        %v335 = vld [vmem:[#allocation5 + $0xb0] sm:$0xf]
        %v336 = vld [vmem:[#allocation5 + $0xb4] sm:$0xff]
        %v337 = vld [vmem:[#allocation5 + $0xbc] sm:$0xf]
        %v338 = vld [vmem:[%s2] sm:$0x7]
        %v340 = vlaneseq
        %v341 = vshrl.u32 %v340, 7
        %v342 = vsub.s32 0, %v341
        %v343 = vrot.slane %v338, %v342
        %v344 = vlaneseq
        %v345 = vshrl.u32 %v344, 7
        %v346 = vsub.s32 1, %v345
        %v347 = vrot.slane %v338, %v346
        %v348 = vlaneseq
        %v349 = vshrl.u32 %v348, 7
        %v350 = vsub.s32 2, %v349
        %v351 = vrot.slane %v338, %v350
        %v387 = vunpack.c.l.b16 %v306
        %v388 = vunpack.c.h.b16 %v306
        %v389 = vunpack.c.l.b16 %v307
        %v390 = vunpack.c.l.b16 %v308
        %v391 = vunpack.c.h.b16 %v308
        %v392 = vunpack.c.l.b16 %v309
        %v393 = vunpack.c.l.b16 %v310
        %v394 = vunpack.c.h.b16 %v310
        %v395 = vunpack.c.l.b16 %v311
        %v396 = vunpack.c.l.b16 %v312
        %v397 = vunpack.c.h.b16 %v312
        %v398 = vunpack.c.l.b16 %v313
        %v399 = vunpack.c.l.b16 %v314
        %v400 = vunpack.c.h.b16 %v314
        %v401 = vunpack.c.l.b16 %v315
        %v402 = vunpack.c.l.b16 %v316
        %v403 = vunpack.c.h.b16 %v316
        %v404 = vunpack.c.l.b16 %v317
        %v405 = vunpack.c.l.b16 %v318
        %v406 = vunpack.c.h.b16 %v318
        %v407 = vunpack.c.l.b16 %v319
        %v408 = vunpack.c.l.b16 %v320
        %v409 = vunpack.c.h.b16 %v320
        %v410 = vunpack.c.l.b16 %v321
        %v411 = vunpack.c.l.b16 %v322
        %v412 = vunpack.c.h.b16 %v322
        %v413 = vunpack.c.l.b16 %v323
        %v414 = vunpack.c.l.b16 %v324
        %v415 = vunpack.c.h.b16 %v324
        %v416 = vunpack.c.l.b16 %v325
        %v417 = vunpack.c.l.b16 %v326
        %v418 = vunpack.c.h.b16 %v326
        %v419 = vunpack.c.l.b16 %v327
        %v420 = vunpack.c.l.b16 %v328
        %v421 = vunpack.c.h.b16 %v328
        %v422 = vunpack.c.l.b16 %v329
        %v423 = vunpack.c.l.b16 %v330
        %v424 = vunpack.c.h.b16 %v330
        %v425 = vunpack.c.l.b16 %v331
        %v426 = vunpack.c.l.b16 %v332
        %v427 = vunpack.c.h.b16 %v332
        %v428 = vunpack.c.l.b16 %v333
        %v429 = vunpack.c.l.b16 %v334
        %v430 = vunpack.c.h.b16 %v334
        %v431 = vunpack.c.l.b16 %v335
        %v432 = vunpack.c.l.b16 %v336
        %v433 = vunpack.c.h.b16 %v336
        %v434 = vunpack.c.l.b16 %v337
        %v435 = vpack.c.b16 %v390, %v387
        %v436 = vpack.c.b16 %v391, %v388
        %v437 = vpack.c.b16 %v392, %v389
        %v438 = vpack.c.b16 %v396, %v393
        %v439 = vpack.c.b16 %v397, %v394
        %v440 = vpack.c.b16 %v398, %v395
        %v441 = vpack.c.b16 %v402, %v399
        %v442 = vpack.c.b16 %v403, %v400
        %v443 = vpack.c.b16 %v404, %v401
        %v444 = vpack.c.b16 %v408, %v405
        %v445 = vpack.c.b16 %v409, %v406
        %v446 = vpack.c.b16 %v410, %v407
        %v447 = vpack.c.b16 %v414, %v411
        %v448 = vpack.c.b16 %v415, %v412
        %v449 = vpack.c.b16 %v416, %v413
        %v450 = vpack.c.b16 %v420, %v417
        %v451 = vpack.c.b16 %v421, %v418
        %v452 = vpack.c.b16 %v422, %v419
        %v453 = vpack.c.b16 %v426, %v423
        %v454 = vpack.c.b16 %v427, %v424
        %v455 = vpack.c.b16 %v428, %v425
        %v456 = vpack.c.b16 %v432, %v429
        %v457 = vpack.c.b16 %v433, %v430
        %v458 = vpack.c.b16 %v434, %v431
        %483 = vmatprep.subr.bf16.mxu0 %v457
        %484 = vmatpush1.bf16.msra.mxu0 %v456
        %485 = vmatprep.subr.bf16.mxu0 %v454
        %486 = vmatpush1.bf16.msra.mxu0 %v453
        %487 = vmatprep.subr.bf16.mxu0 %v451
        %488 = vmatpush1.bf16.msra.mxu0 %v450
        %489 = vmatprep.subr.bf16.mxu0 %v448
        %490 = vmatpush1.bf16.msra.mxu0 %v447
        %491 = vmatprep.subr.bf16.mxu0 %v445
        %492 = vmatpush1.bf16.msra.mxu0 %v444
        %493 = vmatprep.subr.bf16.mxu0 %v442
        %494 = vmatpush1.bf16.msra.mxu0 %v441
        %495 = vmatprep.subr.bf16.mxu0 %v439
        %496 = vmatpush1.bf16.msra.mxu0 %v438
        %497 = vmatprep.subr.bf16.mxu0 %v436
        %498 = vmatpush1.bf16.msra.mxu0 %v435
        %499 = vmatprep.subr.bf16.mxu0 0
        %500 = vmatpush2.bf16.msra.mxu0 0
        %501 = vmatprep.subr.bf16.mxu0 0
        %502 = vmatpush2.bf16.msra.mxu0 0
        %503 = vmatprep.subr.bf16.mxu0 0
        %504 = vmatpush2.bf16.msra.mxu0 0
        %505 = vmatprep.subr.bf16.mxu0 0
        %506 = vmatpush2.bf16.msra.mxu0 0
        %507 = vmatprep.subr.bf16.mxu0 0
        %508 = vmatpush2.bf16.msra.mxu0 0
        %509 = vmatprep.subr.bf16.mxu0 0
        %510 = vmatpush2.bf16.msra.mxu0 0
        %511 = vmatprep.subr.bf16.mxu0 0
        %512 = vmatpush2.bf16.msra.mxu0 0
        %513 = vmatprep.subr.bf16.mxu0 0
        %514 = vmatpush2.bf16.msra.mxu0 0
        %515 = vmatprep.mubr.bf16.mxu0 0
        %516 = vmatmul.mubr.bf16.gmra.mxu0 %v305
        %v517 = vpop.f32.mrf.mxu0
        %v518 = vadd.f32 %v343, %v517
        %v519 = vpop.f32.mrf.mxu0
        %v520 = vadd.f32 %v347, %v519
        %v521 = vpop.f32.mrf.mxu0
        %v522 = vadd.f32 %v343, %v521
        %v523 = vpop.f32.mrf.mxu0
        %v524 = vadd.f32 %v347, %v523
        %525 = vdwg.mxu0
        %526 = vmatprep.subr.bf16.mxu0 0
        %527 = vmatpush1.bf16.msra.mxu0 %v458
        %528 = vmatprep.subr.bf16.mxu0 0
        %529 = vmatpush1.bf16.msra.mxu0 %v455
        %530 = vmatprep.subr.bf16.mxu0 0
        %531 = vmatpush1.bf16.msra.mxu0 %v452
        %532 = vmatprep.subr.bf16.mxu0 0
        %533 = vmatpush1.bf16.msra.mxu0 %v449
        %534 = vmatprep.subr.bf16.mxu0 0
        %535 = vmatpush1.bf16.msra.mxu0 %v446
        %536 = vmatprep.subr.bf16.mxu0 0
        %537 = vmatpush1.bf16.msra.mxu0 %v443
        %538 = vmatprep.subr.bf16.mxu0 0
        %539 = vmatpush1.bf16.msra.mxu0 %v440
        %540 = vmatprep.subr.bf16.mxu0 0
        %541 = vmatpush1.bf16.msra.mxu0 %v437
        %542 = vmatprep.subr.bf16.mxu0 0
        %543 = vmatpush2.bf16.msra.mxu0 0
        %544 = vmatprep.subr.bf16.mxu0 0
        %545 = vmatpush2.bf16.msra.mxu0 0
        %546 = vmatprep.subr.bf16.mxu0 0
        %547 = vmatpush2.bf16.msra.mxu0 0
        %548 = vmatprep.subr.bf16.mxu0 0
        %549 = vmatpush2.bf16.msra.mxu0 0
        %550 = vmatprep.subr.bf16.mxu0 0
        %551 = vmatpush2.bf16.msra.mxu0 0
        %552 = vmatprep.subr.bf16.mxu0 0
        %553 = vmatpush2.bf16.msra.mxu0 0
        %554 = vmatprep.subr.bf16.mxu0 0
        %555 = vmatpush2.bf16.msra.mxu0 0
        %556 = vmatprep.subr.bf16.mxu0 0
        %557 = vmatpush2.bf16.msra.mxu0 0
        %558 = vmatprep.mubr.bf16.mxu0 0
        %559 = vmatmul.mubr.bf16.gmra.mxu0 %v305
        %v560 = vpop.f32.mrf.mxu0
        %v561 = vadd.f32 %v351, %v560
        %v562 = vpop.f32.mrf.mxu0
        %v563 = vpop.f32.mrf.mxu0
        %v564 = vadd.f32 %v351, %v563
        %v565 = vpop.f32.mrf.mxu0
        %566 = vdwg.mxu0
        %v567 = vpack.c.bf16 %v522, %v518
        %v569 = vunpack.c.l.b16 %v567
        %v570 = vunpack.c.h.b16 %v567
        %v571 = vpack.c.b16 %v569, %v569
        %v572 = vpack.c.b16 %v570, %v570
        %575 = vst [vmem:[%s283] sm:$0xf] %v571
        %576 = vst [vmem:[%s283 + $0x4] sm:$0xf] %v572
        %v577 = vpack.c.bf16 %v524, %v520
        %v579 = vunpack.c.l.b16 %v577
        %v580 = vunpack.c.h.b16 %v577
        %v581 = vpack.c.b16 %v579, %v579
        %v582 = vpack.c.b16 %v580, %v580
        %585 = vst [vmem:[%s290] sm:$0xf] %v581
        %586 = vst [vmem:[%s290 + $0x4] sm:$0xf] %v582
        %v587 = vpack.c.bf16 %v564, %v561
        %v589 = vunpack.c.l.b16 %v587
        %v590 = vunpack.c.h.b16 %v587
        %v591 = vpack.c.b16 %v589, %v589
        %v592 = vpack.c.b16 %v590, %v590
        %595 = vst [vmem:[%s297] sm:$0xf] %v591
        %596 = vst [vmem:[%s297 + $0x4] sm:$0xf] %v592
        %s597 = sand.u32 %s119, 1
        %s598 = scalar_lea.sflag [#allocation4], %s597
        %s599 = sand.u32 %s119, 1
        %s600 = smul.addr %s599, 8
        %s601 = scalar_lea.vmem [#allocation7], %s600
        %s602 = sand.u32 %s27, 1
        %s603 = scalar_lea.sflag [#allocation9], %s602
        %s604 = sand.u32 %s147, 1
        %s605 = smul.addr %s604, 8
        %s606 = scalar_lea.vmem [#allocation8], %s605
        %s607 = sand.u32 %s27, 1
        %s608 = scalar_lea.sflag [#allocation9], %s607
        %s609 = sand.u32 %s175, 1
        %s610 = smul.addr %s609, 8
        %s611 = scalar_lea.vmem [#allocation10], %s610
        // Predicated region
        $region41: #{tpu_custom_call.1} parent=31 // pred_check
          %p612 = pneg %p129
        $region42: #{tpu_custom_call.1} parent=31 // pred_check_branch
          %614 = sbr.rel (%p612) target = $region44
        $region43: #{tpu_custom_call.1} parent=31 // pred_region
          %s615 = smul.u32 2, %s32
          %s617 = ssub.s32 128, 128
          %618 = vsyncadd %s598, %s617
          %s619 = smul.addr %s31, 4
          %s620 = sadd.s32 %s615, %s619
          %s621 = smul.addr %s620, 64
          %s622 = scalar_lea.hbm %s3, %s621
          %s623 = sshll.u32 %s601, 4
          %s624 = int_to_ptr.vmem [resolvable:$true] %s623
          %629 = dma.vmem_to_hbm [thread:$0]  %s624, 128, %s622, %s598, 64, 64, 4
        $region44: #{tpu_custom_call.1} parent=31 // pred_fallthru
          _
        // Predicated region
        $region45: #{tpu_custom_call.1} parent=31 // pred_check
          %p630 = pneg %p157
        $region46: #{tpu_custom_call.1} parent=31 // pred_check_branch
          %632 = sbr.rel (%p630) target = $region48
        $region47: #{tpu_custom_call.1} parent=31 // pred_region
          %s633 = smul.u32 2, %s32
          %s635 = ssub.s32 128, 128
          %636 = vsyncadd %s603, %s635
          %s637 = smul.addr %s31, 4
          %s638 = sadd.s32 %s633, %s637
          %s639 = smul.addr %s638, 64
          %s640 = scalar_lea.hbm %s4, %s639
          %s641 = sshll.u32 %s606, 4
          %s642 = int_to_ptr.vmem [resolvable:$true] %s641
          %647 = dma.vmem_to_hbm [thread:$0]  %s642, 128, %s640, %s603, 64, 64, 4
        $region48: #{tpu_custom_call.1} parent=31 // pred_fallthru
          _
        // Predicated region
        $region49: #{tpu_custom_call.1} parent=31 // pred_check
          %p648 = pneg %p185
        $region50: #{tpu_custom_call.1} parent=31 // pred_check_branch
          %650 = sbr.rel (%p648) target = $region52
        $region51: #{tpu_custom_call.1} parent=31 // pred_region
          %s651 = smul.u32 2, %s32
          %s653 = ssub.s32 128, 128
          %654 = vsyncadd %s608, %s653
          %s655 = smul.addr %s31, 4
          %s656 = sadd.s32 %s651, %s655
          %s657 = smul.addr %s656, 64
          %s658 = scalar_lea.hbm %s5, %s657
          %s659 = sshll.u32 %s611, 4
          %s660 = int_to_ptr.vmem [resolvable:$true] %s659
          %665 = dma.vmem_to_hbm [thread:$0]  %s660, 128, %s658, %s608, 64, 64, 4
        $region52: #{tpu_custom_call.1} parent=31 // pred_fallthru
          _
      $region32: #{tpu_custom_call.1} parent=5 // pred_fallthru
        _
      %p666 = scmp.le.s32.totalorder 2, %s22
      // Predicated region
      $region53: #{tpu_custom_call.1} parent=5 // pred_check
        %p667 = pneg %p666
      $region54: #{tpu_custom_call.1} parent=5 // pred_check_branch
        %669 = sbr.rel (%p667) target = $region56
      $region55: #{tpu_custom_call.1} parent=5 // pred_region
        %s670 = ssub.s32 %s22, 2
        // Predicated region
        $region57: #{tpu_custom_call.1} parent=55 // pred_check
          %p671 = pneg %p135
        $region58: #{tpu_custom_call.1} parent=55 // pred_check_branch
          %673 = sbr.rel (%p671) target = $region60
        $region59: #{tpu_custom_call.1} parent=55 // pred_region
          %s674 = sand.u32 %s120, 1
          %s675 = scalar_lea.sflag [#allocation4], %s674
          %s676 = sand.u32 %s120, 1
          %s677 = smul.addr %s676, 8
          %s678 = scalar_lea.vmem [#allocation7], %s677
          %679 = dma.done %s675, 128
        $region60: #{tpu_custom_call.1} parent=55 // pred_fallthru
          _
        // Predicated region
        $region61: #{tpu_custom_call.1} parent=55 // pred_check
          %p680 = pneg %p163
        $region62: #{tpu_custom_call.1} parent=55 // pred_check_branch
          %682 = sbr.rel (%p680) target = $region64
        $region63: #{tpu_custom_call.1} parent=55 // pred_region
          %s683 = sand.u32 %s28, 1
          %s684 = scalar_lea.sflag [#allocation9], %s683
          %s685 = sand.u32 %s148, 1
          %s686 = smul.addr %s685, 8
          %s687 = scalar_lea.vmem [#allocation8], %s686
          %688 = dma.done %s684, 128
        $region64: #{tpu_custom_call.1} parent=55 // pred_fallthru
          _
        // Predicated region
        $region65: #{tpu_custom_call.1} parent=55 // pred_check
          %p689 = pneg %p191
        $region66: #{tpu_custom_call.1} parent=55 // pred_check_branch
          %691 = sbr.rel (%p689) target = $region68
        $region67: #{tpu_custom_call.1} parent=55 // pred_region
          %s692 = sand.u32 %s28, 1
          %s693 = scalar_lea.sflag [#allocation9], %s692
          %s694 = sand.u32 %s176, 1
          %s695 = smul.addr %s694, 8
          %s696 = scalar_lea.vmem [#allocation10], %s695
          %697 = dma.done %s693, 128
        $region68: #{tpu_custom_call.1} parent=55 // pred_fallthru
          _
      $region56: #{tpu_custom_call.1} parent=5 // pred_fallthru
        _
    $region6: #{tpu_custom_call.1} parent=1 // loop_footer
      %s26 = sadd.s32 1, %s22
    $region7: #{tpu_custom_call.1} parent=1 // loop_footer_branch
      %21 = sbr.rel target = $region3
    $region8: #{tpu_custom_call.1} parent=1 // loop_exit
      _
    %698 = vsyncpa [#allocation3], 1
    %s699 = scalar_lea.sflag [#allocation3], 1
    %700 = vsyncpa %s699, 1
    %701 = vsyncpa [#allocation6], 1
    %702 = vsyncpa [#allocation4], 1
    %s703 = scalar_lea.sflag [#allocation4], 1
    %704 = vsyncpa %s703, 1
    %705 = vsyncpa [#allocation9], 1
    %s706 = scalar_lea.sflag [#allocation9], 1
    %707 = vsyncpa %s706, 1

</llo_original>
